<compile_context>
chip_gen: v7x
topology: tpu7x:2x2x1
jax: 0.10.0
libtpu: 0.0.40
codegen_flags: <defaults>
</compile_context>

<pallas_src>
import jax
import jax.numpy as jnp
from jax.experimental import pallas as pl
from jax.experimental.pallas import tpu as pltpu


def _round_up(v: int, m: int) -> int:
    return (v + m - 1) // m * m


def _vmem_capacity_bytes() -> int:
    """Physical VMEM per TensorCore; conservative default if unqueryable."""
    try:
        info = pltpu.get_tpu_info()
        cap = getattr(info, "vmem_capacity_bytes", None)
        if cap:
            return int(cap)
    except Exception:
        pass
    return 64 * 1024 * 1024  # v7x-sized fallback (most restrictive)


def numeric_projection_kernel(x_ref, wbd_ref, b_ref, o_ref):
    # x_ref  : (TB, N)     batch tile with all numeric input columns
    # wbd_ref: (N, N*S)    block-diagonal stacked Linear(1, S) weights (resident)
    # b_ref  : (1, N*S)    flattened biases                           (resident)
    # o_ref  : (TB, N*S)   lane-dense output slab; variable n owns lanes [n*S,(n+1)*S)
    acc = jnp.dot(x_ref[...], wbd_ref[...], preferred_element_type=jnp.float32)
    o_ref[...] = (acc + b_ref[...]).astype(o_ref.dtype)


def numeric_input_transformation(x, weights, biases, *, batch_tile=None, out_dtype=None):
    """
    x       : (batch, num_inputs)        float32
    weights : (num_inputs, state_size)   float32  (W_i = Linear_i.weight.squeeze(-1))
    biases  : (num_inputs, state_size)   float32  (b_i = Linear_i.bias)
    returns : (batch, num_inputs, state_size) stacked embeddings; element i of the
              PyTorch output list is out[:, i, :].
    """
    B, N = x.shape
    S = weights.shape[1]
    out_dtype = x.dtype if out_dtype is None else out_dtype

    # Block-diagonal weight: Wbd[n, n*S:(n+1)*S] = weights[n], zeros elsewhere.
    eye = jnp.eye(N, dtype=weights.dtype)
    wbd = (eye[:, :, None] * weights[None, :, :]).reshape(N, N * S)
    b_flat = biases.reshape(1, N * S)

    out_elt = jnp.dtype(out_dtype).itemsize
    in_elt = jnp.dtype(x.dtype).itemsize
    resident_bytes = (wbd.size * jnp.dtype(wbd.dtype).itemsize
                      + b_flat.size * jnp.dtype(b_flat.dtype).itemsize)

    vmem_cap = _vmem_capacity_bytes()
    # Stay well under physical VMEM; scoped default is raised via CompilerParams.
    vmem_limit = int(min(vmem_cap // 2, 64 * 1024 * 1024))

    if batch_tile is None:
        # Mem-bound kernels plateau at ~1-4 MiB tiles; allow bigger on 128 MiB chips.
        out_tile_cap = 4 * 1024 * 1024 if vmem_cap <= 64 * 1024 * 1024 else 8 * 1024 * 1024
        row_bytes = N * S * out_elt + N * in_elt            # one row of out + x
        avail = max(vmem_limit - resident_bytes, 1 * 1024 * 1024)
        tb_by_vmem = avail // (2 * row_bytes)               # double-buffered in/out tiles
        tb_by_cap = out_tile_cap // max(N * S * out_elt, 1)
        tb = max(8, (min(tb_by_vmem, tb_by_cap) // 8) * 8)
        # Keep >= ~16 total grid steps when the batch allows (pipeline ramp + 2-TC split).
        target_steps = 16
        tb_for_steps = max(8, _round_up(pl.cdiv(B, target_steps), 8))
        tb = min(tb, tb_for_steps)
        batch_tile = min(tb, _round_up(B, 8))
    TB = int(batch_tile)
    if B < 8:
        TB = B   # full-extent block satisfies the (8,128) rule for tiny batches

    grid = (pl.cdiv(B, TB),)

    out = pl.pallas_call(
        numeric_projection_kernel,
        out_shape=jax.ShapeDtypeStruct((B, N * S), out_dtype),
        grid_spec=pltpu.PrefetchScalarGridSpec(
            num_scalar_prefetch=0,
            grid=grid,
            in_specs=[
                pl.BlockSpec((TB, N), lambda i: (i, 0)),        # batch-tiled inputs
                pl.BlockSpec((N, N * S), lambda i: (0, 0)),     # Wbd: resident, no re-DMA
                pl.BlockSpec((1, N * S), lambda i: (0, 0)),     # bias: resident, no re-DMA
            ],
            out_specs=pl.BlockSpec((TB, N * S), lambda i: (i, 0)),  # lane-dense slab
        ),
        compiler_params=pltpu.CompilerParams(
            dimension_semantics=("parallel",),                  # batch tiles -> megacore
            vmem_limit_bytes=vmem_limit,
        ),
    )(x, wbd, b_flat)

    # Free reshape to (B, N, S); the PyTorch list view is out[:, i, :].
    return out.reshape(B, N, S)


def init_params(key, num_inputs, state_size):
    # nn.Linear(1, state_size): fan_in = 1 -> uniform(-1, 1) for weight and bias.
    kw, kb = jax.random.split(key)
    weights = jax.random.uniform(kw, (num_inputs, state_size), jnp.float32, -1.0, 1.0)
    biases = jax.random.uniform(kb, (num_inputs, state_size), jnp.float32, -1.0, 1.0)
    return weights, biases


if __name__ == "__main__":
    batch = 8
    num_inputs = 4
    state_size = 32

    key = jax.random.PRNGKey(0)
    kx, kp = jax.random.split(key)
    x = jax.random.normal(kx, (batch, num_inputs), dtype=jnp.float32)
    weights, biases = init_params(kp, num_inputs, state_size)

    proj = numeric_input_transformation(x, weights, biases)
    proj = jax.block_until_ready(proj)

    # Pure-JAX reference of the PyTorch forward: layer_i(x[:, [i]]) for all i.
    ref = x[:, :, None] * weights[None, :, :] + biases[None, :, :]
    ok = proj.shape == (batch, num_inputs, state_size)
    ok = ok and bool(jnp.allclose(proj, ref, atol=1e-5, rtol=1e-5))
    for i in range(num_inputs):   # also verify the per-variable (list-view) semantics
        ref_i = x[:, i:i + 1] * weights[i][None, :] + biases[i][None, :]
        ok = ok and bool(jnp.allclose(proj[:, i, :], ref_i, atol=1e-5, rtol=1e-5))

    if ok:
        print("KERNEL_OK")
    else:
        raise SystemExit("mismatch vs reference")
</pallas_src>

<mosaic_0001>
module attributes {stable_mosaic.version = 11 : i64} {
  func.func @numeric_projection_kernel(%arg0: i32, %arg1: memref<8x4xf32, #tpu.memory_space<vmem>>, %arg2: memref<4x128xf32, #tpu.memory_space<vmem>>, %arg3: memref<1x128xf32, #tpu.memory_space<vmem>>, %arg4: memref<8x128xf32, #tpu.memory_space<vmem>>) attributes {dimension_semantics = [#tpu.dimension_semantics<parallel>], iteration_bounds = array<i64: 1>, scalar_prefetch = 0 : i64, scratch_operands = 0 : i64, tpu.core_type = #tpu.core_type<tc>, window_params = [{transform_indices = @transform_0, window_bounds = array<i64: 8, 4>}, {pipeline_mode = #tpu.pipeline_mode<synchronous>, transform_indices = @transform_1, window_bounds = array<i64: 4, 128>}, {pipeline_mode = #tpu.pipeline_mode<synchronous>, transform_indices = @transform_2, window_bounds = array<i64: 1, 128>}, {transform_indices = @transform_3, window_bounds = array<i64: 8, 128>}]} {
    %c0 = arith.constant 0 : index
    %c0_0 = arith.constant 0 : index
    %0 = vector.load %arg1[%c0, %c0_0] : memref<8x4xf32, #tpu.memory_space<vmem>>, vector<8x4xf32>
    %c0_1 = arith.constant 0 : index
    %c0_2 = arith.constant 0 : index
    %1 = vector.load %arg2[%c0_1, %c0_2] : memref<4x128xf32, #tpu.memory_space<vmem>>, vector<4x128xf32>
    %cst = arith.constant dense<0.000000e+00> : vector<8x128xf32>
    %2 = tpu.matmul %0, %1, %cst {dimension_numbers = #tpu.dot_dimension_numbers<[1], [0], [0], [1], [0, 0, 1, 1], [], []>} : vector<8x4xf32>, vector<4x128xf32>, vector<8x128xf32> -> vector<8x128xf32>
    %c0_3 = arith.constant 0 : index
    %c0_4 = arith.constant 0 : index
    %3 = vector.load %arg3[%c0_3, %c0_4] : memref<1x128xf32, #tpu.memory_space<vmem>>, vector<1x128xf32>
    %4 = vector.broadcast %3 : vector<1x128xf32> to vector<8x128xf32>
    %5 = arith.addf %2, %4 : vector<8x128xf32>
    %c0_5 = arith.constant 0 : index
    %c0_6 = arith.constant 0 : index
    %6 = vector.load %arg4[%c0_5, %c0_6] : memref<8x128xf32, #tpu.memory_space<vmem>>, vector<8x128xf32>
    tpu.vector_store %arg4[%c0_5, %c0_6], %5 {strides = array<i32>} : memref<8x128xf32, #tpu.memory_space<vmem>>, vector<8x128xf32>,
    return
  }
  func.func @transform_0(%arg0: i32) -> (i32, i32) {
    %c0_i32 = arith.constant 0 : i32
    %c0_i32_0 = arith.constant 0 : i32
    return %arg0, %c0_i32 : i32, i32
  }
  func.func @transform_1(%arg0: i32) -> (i32, i32) {
    %c0_i32 = arith.constant 0 : i32
    %c0_i32_0 = arith.constant 0 : i32
    %c0_i32_1 = arith.constant 0 : i32
    return %c0_i32, %c0_i32_0 : i32, i32
  }
  func.func @transform_2(%arg0: i32) -> (i32, i32) {
    %c0_i32 = arith.constant 0 : i32
    %c0_i32_0 = arith.constant 0 : i32
    %c0_i32_1 = arith.constant 0 : i32
    return %c0_i32, %c0_i32_0 : i32, i32
  }
  func.func @transform_3(%arg0: i32) -> (i32, i32) {
    %c0_i32 = arith.constant 0 : i32
    %c0_i32_0 = arith.constant 0 : i32
    return %arg0, %c0_i32 : i32, i32
  }
}

</mosaic_0001>

<llo_original>
// kernel: tpu_custom_call.1
$region0: #{tpu_custom_call.1}
  #allocation0 [shape = 'u32[]', space=smem, size = 0x4, offset = 0x4, fixed_abs, tag = 'smem constant byte address 0x4 - core index']
  #allocation1 [shape = 'u32[144,128]{1,0:T(1,128)}', space=vmem, size = 0x12000, scoped, tag = 'internal scratch']
  %s0 = inlined_call_operand.vmem [shape: f32[8,4], index: 0, kind: input, shape index: {}]
  %s1 = inlined_call_operand.vmem [shape: f32[4,128], index: 1, kind: input, shape index: {}]
  %s2 = inlined_call_operand.vmem [shape: f32[1,128], index: 2, kind: input, shape index: {}]
  %s3 = inlined_call_operand.hbm [shape: f32[8,128], index: 3, kind: output, shape index: {}]
  %s4 = sld [smem:[#allocation0]]
  $region22: #{tpu_custom_call.1} parent=0
    _
  %s6 = ssub.s32 1, %s4
  %s7 = scalar_select 0, %s6, %s4
  $region1: #{tpu_custom_call.1} parent=0
    #allocation2 [shape = 'u8[4096]{0}', space=vmem, size = 0x1000, scoped, tag = 'output window, operand 0, single buffered']
    #allocation3 [shape = 's32[1]{0}', space=sflag, size = 0x4, scoped, tag = 'scoped memory for tpu_custom_call.1']
    %8 = vsyncpa [#allocation3], 0
    // Predicated region
    $region2: #{tpu_custom_call.1} parent=1 // pred_check
      _
    $region3: #{tpu_custom_call.1} parent=1 // pred_check_branch
      %10 = sbr.rel (0) target = $region5
    $region4: #{tpu_custom_call.1} parent=1 // pred_region
      _
    $region5: #{tpu_custom_call.1} parent=1 // pred_fallthru
      _
    // Predicated region
    $region6: #{tpu_custom_call.1} parent=1 // pred_check
      _
    $region7: #{tpu_custom_call.1} parent=1 // pred_check_branch
      %12 = sbr.rel (0) target = $region9
    $region8: #{tpu_custom_call.1} parent=1 // pred_region
      _
    $region9: #{tpu_custom_call.1} parent=1 // pred_fallthru
      _
    // Predicated region
    $region10: #{tpu_custom_call.1} parent=1 // pred_check
      _
    $region11: #{tpu_custom_call.1} parent=1 // pred_check_branch
      %14 = sbr.rel (0) target = $region13
    $region12: #{tpu_custom_call.1} parent=1 // pred_region
      _
    $region13: #{tpu_custom_call.1} parent=1 // pred_fallthru
      _
    %v15 = vld [vmem:[%s0] sm:$0xff]
    %v16 = vld [vmem:[%s1] sm:$0xf]
    %v17 = vld [vmem:[%s2] sm:$0x1]
    %v19 = vlaneseq
    %v20 = vshrl.u32 %v19, 7
    %v21 = vsub.s32 0, %v20
    %v22 = vrot.slane %v17, %v21
    %vm24 = vcmask 31744
    %v26 = vsel %vm24, %v15, 0
    %vm28 = vcmask 1043456
    %v30 = vsel %vm28, %v16, 0
    %32 = vmatprep.subr.mxu0 0.0
    %33 = vmatpush1.msra.mxu0 %v30
    %34 = vmatprep.subr.mxu0 0.0
    %35 = vmatpush1.msra.mxu0 0.0
    %36 = vmatprep.subr.mxu0 0.0
    %37 = vmatpush1.msra.mxu0 0.0
    %38 = vmatprep.subr.mxu0 0.0
    %39 = vmatpush1.msra.mxu0 0.0
    %40 = vmatprep.subr.mxu0 0.0
    %41 = vmatpush1.msra.mxu0 0.0
    %42 = vmatprep.subr.mxu0 0.0
    %43 = vmatpush1.msra.mxu0 0.0
    %44 = vmatprep.subr.mxu0 0.0
    %45 = vmatpush1.msra.mxu0 0.0
    %46 = vmatprep.subr.mxu0 0.0
    %47 = vmatpush1.msra.mxu0 0.0
    %48 = vmatprep.subr.mxu0 0.0
    %49 = vmatpush1.msra.mxu0 0.0
    %50 = vmatprep.subr.mxu0 0.0
    %51 = vmatpush1.msra.mxu0 0.0
    %52 = vmatprep.subr.mxu0 0.0
    %53 = vmatpush1.msra.mxu0 0.0
    %54 = vmatprep.subr.mxu0 0.0
    %55 = vmatpush1.msra.mxu0 0.0
    %56 = vmatprep.subr.mxu0 0.0
    %57 = vmatpush1.msra.mxu0 0.0
    %58 = vmatprep.subr.mxu0 0.0
    %59 = vmatpush1.msra.mxu0 0.0
    %60 = vmatprep.subr.mxu0 0.0
    %61 = vmatpush1.msra.mxu0 0.0
    %62 = vmatprep.subr.mxu0 0.0
    %63 = vmatpush1.msra.mxu0 0.0
    %64 = vmatprep.subr.mxu0 0.0
    %65 = vmatpush1.msra.mxu0 0.0
    %66 = vmatprep.subr.mxu0 0.0
    %67 = vmatpush1.msra.mxu0 0.0
    %68 = vmatprep.subr.mxu0 0.0
    %69 = vmatpush1.msra.mxu0 0.0
    %70 = vmatprep.subr.mxu0 0.0
    %71 = vmatpush1.msra.mxu0 0.0
    %72 = vmatprep.subr.mxu0 0.0
    %73 = vmatpush1.msra.mxu0 0.0
    %74 = vmatprep.subr.mxu0 0.0
    %75 = vmatpush1.msra.mxu0 0.0
    %76 = vmatprep.subr.mxu0 0.0
    %77 = vmatpush1.msra.mxu0 0.0
    %78 = vmatprep.subr.mxu0 0.0
    %79 = vmatpush1.msra.mxu0 0.0
    %80 = vmatprep.subr.mxu0 0.0
    %81 = vmatpush1.msra.mxu0 0.0
    %82 = vmatprep.subr.mxu0 0.0
    %83 = vmatpush1.msra.mxu0 0.0
    %84 = vmatprep.subr.mxu0 0.0
    %85 = vmatpush1.msra.mxu0 0.0
    %86 = vmatprep.subr.mxu0 0.0
    %87 = vmatpush1.msra.mxu0 0.0
    %88 = vmatprep.subr.mxu0 0.0
    %89 = vmatpush1.msra.mxu0 0.0
    %90 = vmatprep.subr.mxu0 0.0
    %91 = vmatpush1.msra.mxu0 0.0
    %92 = vmatprep.subr.mxu0 0.0
    %93 = vmatpush1.msra.mxu0 0.0
    %94 = vmatprep.subr.mxu0 0.0
    %95 = vmatpush1.msra.mxu0 0.0
    %96 = vmatprep.mubr.f32.mxu0 0.0
    %97 = vmatmul.mubr.f32.gmra.mrb[0].mxu0 %v26
    %v98 = vpop.f32.mrb[0].mxu0
    %v99 = vadd.f32 %v22, %v98
    %v100 = vpop.f32.mrb[0].mxu0
    %101 = vdwg.mxu0
    %102 = vst [vmem:[#allocation2] sm:$0xff] %v99
    // Predicated region
    $region14: #{tpu_custom_call.1} parent=1 // pred_check
      _
    $region15: #{tpu_custom_call.1} parent=1 // pred_check_branch
      %104 = sbr.rel (0) target = $region17
    $region16: #{tpu_custom_call.1} parent=1 // pred_region
      %s106 = ssub.s32 128, 128
      %107 = vsyncadd [#allocation3], %s106
      %s109 = sshll.u32 [#allocation2], 4
      %s110 = int_to_ptr.vmem [resolvable:$true] %s109
      %112 = dma.vmem_to_hbm [thread:$0]  %s110, 128, %s3, [#allocation3]
    $region17: #{tpu_custom_call.1} parent=1 // pred_fallthru
      _
    // Predicated region
    $region18: #{tpu_custom_call.1} parent=1 // pred_check
      _
    $region19: #{tpu_custom_call.1} parent=1 // pred_check_branch
      %114 = sbr.rel (0) target = $region21
    $region20: #{tpu_custom_call.1} parent=1 // pred_region
      %115 = dma.done [#allocation3], 128
    $region21: #{tpu_custom_call.1} parent=1 // pred_fallthru
      _
    %116 = vsyncpa [#allocation3], 1

</llo_original>
